<compile_context>
chip_gen: v5e
topology: v5e:2x2
jax: 0.10.0
libtpu: 0.0.40
codegen_flags: <defaults>
</compile_context>

<pallas_src>
import functools

import jax
import jax.numpy as jnp
from jax import lax
from jax.experimental import pallas as pl
from jax.experimental.pallas import tpu as pltpu

LANE = 128  # lane width; classifier output is padded to this for an unmasked vst
_VMEM = pl.BlockSpec(memory_space=pltpu.MemorySpace.VMEM)


def _round_up(v, m):
    return -(-v // m) * m


# ----------------------------------------------------------------------------
# Packed parameter slab layout (single [R, 128] f32 array, one DMA)
# ----------------------------------------------------------------------------
def _make_slab_layout(c_in1, c_in2, heads, out_per_head, lane_width=LANE):
    HF = heads * out_per_head
    layout = {}
    cursor = [0]

    def add(name, nrows, ncols, align=1):
        r0 = _round_up(cursor[0], align)
        layout[name] = (r0, nrows, ncols)
        cursor[0] = r0 + nrows

    add("w1_ext", c_in1, HF + heads, align=8)   # [W1 | W1·a_dst1]
    add("w2_ext", c_in2, HF + heads, align=8)   # [W2 | W2·a_dst2]
    add("wc", c_in2, lane_width, align=8)       # classifier weight, lane-padded
    add("b1", 1, HF, align=8)                   # conv1 bias (heads concatenated)
    add("b2", 1, HF)                            # conv2 bias
    add("bc", 1, lane_width)                    # classifier bias, lane-padded
    add("wsrc1_t", heads, c_in1)                # (W1·a_src1)^T
    add("wsrc2_t", heads, c_in2)                # (W2·a_src2)^T
    return layout, _round_up(cursor[0], 8)


def _fold_conv_params(p):
    """Fold the per-head attention projections into the weight matrix."""
    H, F = p["heads"], p["out_per_head"]
    w = p["w"]                                                      # [c_in, H*F]
    w_dst = jnp.stack([w[:, h * F:(h + 1) * F] @ p["att_dst"][h] for h in range(H)], axis=1)
    w_src = jnp.stack([w[:, h * F:(h + 1) * F] @ p["att_src"][h] for h in range(H)], axis=1)
    w_ext = jnp.concatenate([w, w_dst], axis=1)                     # [c_in, H*F + H]
    return w_ext, w_src.T, p["bias"].reshape(1, H * F)


def pack_param_slab(params, num_classes, lane_width=LANE):
    c1, c2 = params["conv1"], params["conv2"]
    H, F = c1["heads"], c1["out_per_head"]
    c_in1, c_in2 = c1["w"].shape[0], c2["w"].shape[0]
    layout, nrows = _make_slab_layout(c_in1, c_in2, H, F, lane_width)

    w1_ext, wsrc1_t, b1 = _fold_conv_params(c1)
    w2_ext, wsrc2_t, b2 = _fold_conv_params(c2)
    wc = jnp.zeros((c_in2, lane_width), jnp.float32).at[:, :num_classes].set(params["cls_w"])
    bc = jnp.zeros((1, lane_width), jnp.float32).at[:, :num_classes].set(params["cls_b"])

    slab = jnp.zeros((nrows, lane_width), jnp.float32)

    def put(s, name, val):
        r0, nr, nc = layout[name]
        assert val.shape == (nr, nc), (name, val.shape, (nr, nc))
        return s.at[r0:r0 + nr, :nc].set(val)

    for name, val in (("w1_ext", w1_ext), ("w2_ext", w2_ext), ("wc", wc),
                      ("b1", b1), ("b2", b2), ("bc", bc),
                      ("wsrc1_t", wsrc1_t), ("wsrc2_t", wsrc2_t)):
        slab = put(slab, name, val)
    return slab, layout


# ----------------------------------------------------------------------------
# Fused Pallas kernel: conv1 -> relu -> conv2 -> relu -> linear classifier
# ----------------------------------------------------------------------------
def _fused_gat_kernel(x_ref, adjb_ref, slab_ref, out_ref, *, heads, out_per_head, layout):
    H, F = heads, out_per_head
    HF = H * F
    N = x_ref.shape[0]

    def view(name):
        r0, nr, nc = layout[name]
        return slab_ref[r0:r0 + nr, 0:nc]

    # Additive adjacency mask: 0 on edges (incl. self-loops), -1e30 elsewhere.
    # Shipped pre-built in f32 -> no bf16 upconvert / compare+select on v5e.
    # Correctness relies on add_self_loops=True: every destination row has at
    # least one 0 entry, so the masked softmax never degenerates.
    adj_bias = adjb_ref[...]

    def gat_layer(x, w_ext_name, wsrc_t_name, b_name):
        # ONE MXU dot gives the feature transform (cols 0:HF) AND the per-head
        # destination logits (cols HF:HF+H; a_dst folded host-side into W_ext).
        xw_ext = jnp.dot(x, view(w_ext_name), preferred_element_type=jnp.float32)  # [N, HF+H]
        # Source logits directly in [H, N] lane orientation (one NT dot on x).
        a_src_t = lax.dot_general(view(wsrc_t_name), x,
                                  dimension_numbers=(((1,), (1,)), ((), ())),
                                  preferred_element_type=jnp.float32)              # [H, N]

        attn_blocks = []
        for h in range(H):                                        # static unroll (H=2)
            e = xw_ext[:, HF + h:HF + h + 1] + a_src_t[h:h + 1, :]    # [N, N] broadcast add
            e = jnp.where(e > 0, e, 0.2 * e)                      # LeakyReLU(0.2)
            e = e + adj_bias                                      # mask non-edges
            e = e - jnp.max(e, axis=-1, keepdims=True)
            p = jnp.exp(e)                                        # non-edges -> exactly 0
            inv = pl.reciprocal(jnp.sum(p, axis=-1, keepdims=True), approx=True)
            attn_blocks.append(p * inv)                           # softmax over sources

        # Batched per-head aggregation: stack attention along sublanes and do a
        # SINGLE dot against the full [N, HF] transform, then take the
        # (head-h rows, head-h feature columns) block of the result.
        attn = jnp.concatenate(attn_blocks, axis=0)               # [H*N, N]
        agg = jnp.dot(attn, xw_ext[:, 0:HF], preferred_element_type=jnp.float32)   # [H*N, HF]
        if H == 2:
            lane = lax.broadcasted_iota(jnp.int32, (N, HF), 1)
            hcat = jnp.where(lane < F, agg[0:N, :], agg[N:2 * N, :])               # [N, HF]
        else:
            hcat = jnp.concatenate(
                [agg[h * N:(h + 1) * N, h * F:(h + 1) * F] for h in range(H)], axis=1)
        # GATConv bias (heads concatenated) + fused ReLU.
        return jnp.maximum(hcat + view(b_name), 0.0)

    h1 = gat_layer(x_ref[...], "w1_ext", "wsrc1_t", "b1")         # conv1 + relu
    # TODO(synk): dropout p=0.5 -> identity (eval-mode semantics)
    h2 = gat_layer(h1, "w2_ext", "wsrc2_t", "b2")                 # conv2 + relu
    # TODO(synk): dropout p=0.6 -> identity (eval-mode semantics)
    # Classifier: lane-padded to 128 so the single output store is unmasked.
    out_ref[...] = jnp.dot(h2, view("wc"), preferred_element_type=jnp.float32) + view("bc")


# ----------------------------------------------------------------------------
# Wrapper (whole arrays resident in VMEM — shapes are tiny at N=16)
# ----------------------------------------------------------------------------
def gat_forward(x, adj_bias, slab, layout, *, heads, out_per_head, num_classes,
                lane_width=LANE):
    N = x.shape[0]
    kernel = functools.partial(_fused_gat_kernel, heads=heads,
                               out_per_head=out_per_head, layout=layout)
    out_padded = pl.pallas_call(
        kernel,
        out_shape=jax.ShapeDtypeStruct((N, lane_width), jnp.float32),
        in_specs=[_VMEM, _VMEM, _VMEM],
        out_specs=_VMEM,
    )(x, adj_bias, slab)
    return out_padded[:, :num_classes]


# ----------------------------------------------------------------------------
# Parameter / graph construction (deterministic, synthetic)
# ----------------------------------------------------------------------------
def make_gat_conv_params(key, in_channels, out_per_head, heads):
    k_w, k_s, k_d, k_b = jax.random.split(key, 4)
    HF = heads * out_per_head
    return {
        "heads": heads, "out_per_head": out_per_head,
        "w": 0.1 * jax.random.normal(k_w, (in_channels, HF), jnp.float32),
        "att_src": 0.1 * jax.random.normal(k_s, (heads, out_per_head), jnp.float32),
        "att_dst": 0.1 * jax.random.normal(k_d, (heads, out_per_head), jnp.float32),
        "bias": 0.1 * jax.random.normal(k_b, (heads, out_per_head), jnp.float32),
    }


def edges_to_adj(edge_index, num_nodes):
    """Dense 0/1 adjacency: adj[dst, src] = 1 for each edge, plus self-loops."""
    src, dst = edge_index[0], edge_index[1]
    adj = jnp.zeros((num_nodes, num_nodes), jnp.float32).at[dst, src].set(1.0)
    idx = jnp.arange(num_nodes)
    return adj.at[idx, idx].set(1.0)


def adj_to_bias(adj01):
    """Additive mask: 0 on edges, -1e30 elsewhere (f32)."""
    return jnp.where(adj01 > 0, 0.0, -1e30).astype(jnp.float32)


# ----------------------------------------------------------------------------
# Pure-JAX reference (for a tolerance check against the fused kernel)
# ----------------------------------------------------------------------------
def _gat_conv_ref(x, adj, p):
    H, F = p["heads"], p["out_per_head"]
    N = x.shape[0]
    xw = (x @ p["w"]).reshape(N, H, F)
    a_src = jnp.einsum("nhf,hf->nh", xw, p["att_src"])
    a_dst = jnp.einsum("nhf,hf->nh", xw, p["att_dst"])
    outs = []
    for h in range(H):
        e = a_dst[:, h:h + 1] + a_src[:, h][None, :]
        e = jnp.where(e > 0, e, 0.2 * e)
        e = jnp.where(adj > 0, e, -jnp.inf)
        attn = jax.nn.softmax(e, axis=-1)
        outs.append(attn @ xw[:, h, :])
    return jnp.concatenate(outs, axis=-1) + p["bias"].reshape(1, H * F)


def gat_forward_ref(x, adj, params):
    h = jax.nn.relu(_gat_conv_ref(x, adj, params["conv1"]))
    h = jax.nn.relu(_gat_conv_ref(h, adj, params["conv2"]))
    return h @ params["cls_w"] + params["cls_b"]


# ----------------------------------------------------------------------------
# Main
# ----------------------------------------------------------------------------
if __name__ == "__main__":
    N = 16                 # number of graph nodes
    NUM_FEATURES = 8       # dataset.num_features
    HIDDEN = 8             # hidden_channels
    HEADS = 2              # num_heads
    NUM_CLASSES = 4        # dataset.num_classes

    key = jax.random.PRNGKey(0)
    k_x, k_c1, k_c2, k_cw, k_cb = jax.random.split(key, 5)

    # Node features.
    x = jax.random.normal(k_x, (N, NUM_FEATURES), jnp.float32)

    # Synthetic bidirectional ring graph: edge_index [2, 2N] (source, target).
    arange = jnp.arange(N)
    src = jnp.concatenate([arange, (arange + 1) % N])
    dst = jnp.concatenate([(arange + 1) % N, arange])
    edge_index = jnp.stack([src, dst]).astype(jnp.int32)
    adj01 = edges_to_adj(edge_index, N)        # 0/1 adjacency (reference)
    adj_bias = adj_to_bias(adj01)              # additive f32 mask (kernel input)

    params = {
        "conv1": make_gat_conv_params(k_c1, NUM_FEATURES, HIDDEN, HEADS),
        "conv2": make_gat_conv_params(k_c2, HIDDEN * HEADS, HIDDEN, HEADS),
        "cls_w": 0.1 * jax.random.normal(k_cw, (HIDDEN * HEADS, NUM_CLASSES), jnp.float32),
        "cls_b": 0.1 * jax.random.normal(k_cb, (1, NUM_CLASSES), jnp.float32),
    }

    # Host-side packing of all parameters into one [R, 128] f32 slab (one DMA).
    slab, layout = pack_param_slab(params, NUM_CLASSES)

    out = gat_forward(x, adj_bias, slab, layout,
                      heads=HEADS, out_per_head=HIDDEN, num_classes=NUM_CLASSES)
    jax.block_until_ready(out)
    assert out.shape == (N, NUM_CLASSES) and out.dtype == jnp.float32

    ref = gat_forward_ref(x, adj01, params)
    assert jnp.allclose(out, ref, rtol=1e-2, atol=1e-2), "kernel/reference mismatch"

    print("KERNEL_OK")
</pallas_src>

<mosaic_0001>
module attributes {stable_mosaic.version = 11 : i64} {
  func.func @_fused_gat_kernel(%arg0: memref<16x8xf32, #tpu.memory_space<vmem>>, %arg1: memref<16x16xf32, #tpu.memory_space<vmem>>, %arg2: memref<48x128xf32, #tpu.memory_space<vmem>>, %arg3: memref<16x128xf32, #tpu.memory_space<vmem>>) attributes {dimension_semantics = [], scalar_prefetch = 0 : i64, scratch_operands = 0 : i64, tpu.core_type = #tpu.core_type<tc>} {
    %c0 = arith.constant 0 : index
    %c0_0 = arith.constant 0 : index
    %0 = vector.load %arg1[%c0, %c0_0] : memref<16x16xf32, #tpu.memory_space<vmem>>, vector<16x16xf32>
    %c0_1 = arith.constant 0 : index
    %c0_2 = arith.constant 0 : index
    %1 = vector.load %arg0[%c0_1, %c0_2] : memref<16x8xf32, #tpu.memory_space<vmem>>, vector<16x8xf32>
    %c0_3 = arith.constant 0 : index
    %c0_4 = arith.constant 0 : index
    %2 = vector.load %arg2[%c0_3, %c0_4] : memref<48x128xf32, #tpu.memory_space<vmem>>, vector<8x18xf32>
    %cst = arith.constant dense<0.000000e+00> : vector<16x18xf32>
    %3 = tpu.matmul %1, %2, %cst {dimension_numbers = #tpu.dot_dimension_numbers<[1], [0], [0], [1], [0, 0, 1, 1], [], []>} : vector<16x8xf32>, vector<8x18xf32>, vector<16x18xf32> -> vector<16x18xf32>
    %c43 = arith.constant 43 : index
    %c0_5 = arith.constant 0 : index
    %4 = vector.load %arg2[%c43, %c0_5] : memref<48x128xf32, #tpu.memory_space<vmem>>, vector<2x8xf32>
    %cst_6 = arith.constant dense<0.000000e+00> : vector<2x16xf32>
    %5 = tpu.matmul %4, %1, %cst_6 {dimension_numbers = #tpu.dot_dimension_numbers<[1], [1], [0], [0], [0, 0, 1, 0], [], []>} : vector<2x8xf32>, vector<16x8xf32>, vector<2x16xf32> -> vector<2x16xf32>
    %6 = vector.extract_strided_slice %3 {offsets = [0, 16], sizes = [16, 1], strides = [1, 1]} : vector<16x18xf32> to vector<16x1xf32>
    %7 = vector.extract_strided_slice %5 {offsets = [0, 0], sizes = [1, 16], strides = [1, 1]} : vector<2x16xf32> to vector<1x16xf32>
    %8 = vector.broadcast %6 : vector<16x1xf32> to vector<16x16xf32>
    %9 = vector.broadcast %7 : vector<1x16xf32> to vector<16x16xf32>
    %10 = arith.addf %8, %9 : vector<16x16xf32>
    %cst_7 = arith.constant 0.000000e+00 : f32
    %11 = vector.broadcast %cst_7 : f32 to vector<16x16xf32>
    %12 = arith.cmpf ogt, %10, %11 : vector<16x16xf32>
    %cst_8 = arith.constant 2.000000e-01 : f32
    %13 = vector.broadcast %cst_8 : f32 to vector<16x16xf32>
    %14 = arith.mulf %13, %10 : vector<16x16xf32>
    %15 = arith.select %12, %10, %14 : vector<16x16xi1>, vector<16x16xf32>
    %16 = arith.addf %15, %0 : vector<16x16xf32>
    %cst_9 = arith.constant dense<0xFF800000> : vector<16xf32>
    %17 = vector.multi_reduction <maximumf>, %16, %cst_9 [1] : vector<16x16xf32> to vector<16xf32>
    %18 = vector.shape_cast %17 : vector<16xf32> to vector<16x1xf32>
    %19 = vector.broadcast %18 : vector<16x1xf32> to vector<16x16xf32>
    %20 = arith.subf %16, %19 : vector<16x16xf32>
    %21 = math.exp %20 : vector<16x16xf32>
    %cst_10 = arith.constant dense<0.000000e+00> : vector<16xf32>
    %22 = vector.multi_reduction <add>, %21, %cst_10 [1] : vector<16x16xf32> to vector<16xf32>
    %23 = vector.shape_cast %22 : vector<16xf32> to vector<16x1xf32>
    %24 = tpu.reciprocal %23 {approx = true} : vector<16x1xf32> -> vector<16x1xf32>
    %25 = vector.broadcast %24 : vector<16x1xf32> to vector<16x16xf32>
    %26 = arith.mulf %21, %25 : vector<16x16xf32>
    %27 = vector.extract_strided_slice %3 {offsets = [0, 17], sizes = [16, 1], strides = [1, 1]} : vector<16x18xf32> to vector<16x1xf32>
    %28 = vector.extract_strided_slice %5 {offsets = [1, 0], sizes = [1, 16], strides = [1, 1]} : vector<2x16xf32> to vector<1x16xf32>
    %29 = vector.broadcast %27 : vector<16x1xf32> to vector<16x16xf32>
    %30 = vector.broadcast %28 : vector<1x16xf32> to vector<16x16xf32>
    %31 = arith.addf %29, %30 : vector<16x16xf32>
    %cst_11 = arith.constant 0.000000e+00 : f32
    %32 = vector.broadcast %cst_11 : f32 to vector<16x16xf32>
    %33 = arith.cmpf ogt, %31, %32 : vector<16x16xf32>
    %cst_12 = arith.constant 2.000000e-01 : f32
    %34 = vector.broadcast %cst_12 : f32 to vector<16x16xf32>
    %35 = arith.mulf %34, %31 : vector<16x16xf32>
    %36 = arith.select %33, %31, %35 : vector<16x16xi1>, vector<16x16xf32>
    %37 = arith.addf %36, %0 : vector<16x16xf32>
    %cst_13 = arith.constant dense<0xFF800000> : vector<16xf32>
    %38 = vector.multi_reduction <maximumf>, %37, %cst_13 [1] : vector<16x16xf32> to vector<16xf32>
    %39 = vector.shape_cast %38 : vector<16xf32> to vector<16x1xf32>
    %40 = vector.broadcast %39 : vector<16x1xf32> to vector<16x16xf32>
    %41 = arith.subf %37, %40 : vector<16x16xf32>
    %42 = math.exp %41 : vector<16x16xf32>
    %cst_14 = arith.constant dense<0.000000e+00> : vector<16xf32>
    %43 = vector.multi_reduction <add>, %42, %cst_14 [1] : vector<16x16xf32> to vector<16xf32>
    %44 = vector.shape_cast %43 : vector<16xf32> to vector<16x1xf32>
    %45 = tpu.reciprocal %44 {approx = true} : vector<16x1xf32> -> vector<16x1xf32>
    %46 = vector.broadcast %45 : vector<16x1xf32> to vector<16x16xf32>
    %47 = arith.mulf %42, %46 : vector<16x16xf32>
    %48 = tpu.concatenate %26, %47 in 0 : vector<16x16xf32>, vector<16x16xf32> -> vector<32x16xf32>
    %49 = vector.extract_strided_slice %3 {offsets = [0, 0], sizes = [16, 16], strides = [1, 1]} : vector<16x18xf32> to vector<16x16xf32>
    %cst_15 = arith.constant dense<0.000000e+00> : vector<32x16xf32>
    %50 = tpu.matmul %48, %49, %cst_15 {dimension_numbers = #tpu.dot_dimension_numbers<[1], [0], [0], [1], [0, 0, 1, 1], [], []>} : vector<32x16xf32>, vector<16x16xf32>, vector<32x16xf32> -> vector<32x16xf32>
    %51 = tpu.iota {dimensions = array<i32: 1>} : vector<16x16xi32>
    %c8_i32 = arith.constant 8 : i32
    %52 = vector.broadcast %c8_i32 : i32 to vector<16x16xi32>
    %53 = arith.cmpi slt, %51, %52 : vector<16x16xi32>
    %54 = vector.extract_strided_slice %50 {offsets = [0, 0], sizes = [16, 16], strides = [1, 1]} : vector<32x16xf32> to vector<16x16xf32>
    %55 = vector.extract_strided_slice %50 {offsets = [16, 0], sizes = [16, 16], strides = [1, 1]} : vector<32x16xf32> to vector<16x16xf32>
    %56 = arith.select %53, %54, %55 : vector<16x16xi1>, vector<16x16xf32>
    %c40 = arith.constant 40 : index
    %c0_16 = arith.constant 0 : index
    %57 = vector.load %arg2[%c40, %c0_16] : memref<48x128xf32, #tpu.memory_space<vmem>>, vector<1x16xf32>
    %58 = vector.broadcast %57 : vector<1x16xf32> to vector<16x16xf32>
    %59 = arith.addf %56, %58 : vector<16x16xf32>
    %cst_17 = arith.constant 0.000000e+00 : f32
    %60 = vector.broadcast %cst_17 : f32 to vector<16x16xf32>
    %61 = arith.maximumf %59, %60 : vector<16x16xf32>
    %c8 = arith.constant 8 : index
    %c0_18 = arith.constant 0 : index
    %62 = vector.load %arg2[%c8, %c0_18] : memref<48x128xf32, #tpu.memory_space<vmem>>, vector<16x18xf32>
    %cst_19 = arith.constant dense<0.000000e+00> : vector<16x18xf32>
    %63 = tpu.matmul %61, %62, %cst_19 {dimension_numbers = #tpu.dot_dimension_numbers<[1], [0], [0], [1], [0, 0, 1, 1], [], []>} : vector<16x16xf32>, vector<16x18xf32>, vector<16x18xf32> -> vector<16x18xf32>
    %c45 = arith.constant 45 : index
    %c0_20 = arith.constant 0 : index
    %64 = vector.load %arg2[%c45, %c0_20] : memref<48x128xf32, #tpu.memory_space<vmem>>, vector<2x16xf32>
    %cst_21 = arith.constant dense<0.000000e+00> : vector<2x16xf32>
    %65 = tpu.matmul %64, %61, %cst_21 {dimension_numbers = #tpu.dot_dimension_numbers<[1], [1], [0], [0], [0, 0, 1, 0], [], []>} : vector<2x16xf32>, vector<16x16xf32>, vector<2x16xf32> -> vector<2x16xf32>
    %66 = vector.extract_strided_slice %63 {offsets = [0, 16], sizes = [16, 1], strides = [1, 1]} : vector<16x18xf32> to vector<16x1xf32>
    %67 = vector.extract_strided_slice %65 {offsets = [0, 0], sizes = [1, 16], strides = [1, 1]} : vector<2x16xf32> to vector<1x16xf32>
    %68 = vector.broadcast %66 : vector<16x1xf32> to vector<16x16xf32>
    %69 = vector.broadcast %67 : vector<1x16xf32> to vector<16x16xf32>
    %70 = arith.addf %68, %69 : vector<16x16xf32>
    %cst_22 = arith.constant 0.000000e+00 : f32
    %71 = vector.broadcast %cst_22 : f32 to vector<16x16xf32>
    %72 = arith.cmpf ogt, %70, %71 : vector<16x16xf32>
    %cst_23 = arith.constant 2.000000e-01 : f32
    %73 = vector.broadcast %cst_23 : f32 to vector<16x16xf32>
    %74 = arith.mulf %73, %70 : vector<16x16xf32>
    %75 = arith.select %72, %70, %74 : vector<16x16xi1>, vector<16x16xf32>
    %76 = arith.addf %75, %0 : vector<16x16xf32>
    %cst_24 = arith.constant dense<0xFF800000> : vector<16xf32>
    %77 = vector.multi_reduction <maximumf>, %76, %cst_24 [1] : vector<16x16xf32> to vector<16xf32>
    %78 = vector.shape_cast %77 : vector<16xf32> to vector<16x1xf32>
    %79 = vector.broadcast %78 : vector<16x1xf32> to vector<16x16xf32>
    %80 = arith.subf %76, %79 : vector<16x16xf32>
    %81 = math.exp %80 : vector<16x16xf32>
    %cst_25 = arith.constant dense<0.000000e+00> : vector<16xf32>
    %82 = vector.multi_reduction <add>, %81, %cst_25 [1] : vector<16x16xf32> to vector<16xf32>
    %83 = vector.shape_cast %82 : vector<16xf32> to vector<16x1xf32>
    %84 = tpu.reciprocal %83 {approx = true} : vector<16x1xf32> -> vector<16x1xf32>
    %85 = vector.broadcast %84 : vector<16x1xf32> to vector<16x16xf32>
    %86 = arith.mulf %81, %85 : vector<16x16xf32>
    %87 = vector.extract_strided_slice %63 {offsets = [0, 17], sizes = [16, 1], strides = [1, 1]} : vector<16x18xf32> to vector<16x1xf32>
    %88 = vector.extract_strided_slice %65 {offsets = [1, 0], sizes = [1, 16], strides = [1, 1]} : vector<2x16xf32> to vector<1x16xf32>
    %89 = vector.broadcast %87 : vector<16x1xf32> to vector<16x16xf32>
    %90 = vector.broadcast %88 : vector<1x16xf32> to vector<16x16xf32>
    %91 = arith.addf %89, %90 : vector<16x16xf32>
    %cst_26 = arith.constant 0.000000e+00 : f32
    %92 = vector.broadcast %cst_26 : f32 to vector<16x16xf32>
    %93 = arith.cmpf ogt, %91, %92 : vector<16x16xf32>
    %cst_27 = arith.constant 2.000000e-01 : f32
    %94 = vector.broadcast %cst_27 : f32 to vector<16x16xf32>
    %95 = arith.mulf %94, %91 : vector<16x16xf32>
    %96 = arith.select %93, %91, %95 : vector<16x16xi1>, vector<16x16xf32>
    %97 = arith.addf %96, %0 : vector<16x16xf32>
    %cst_28 = arith.constant dense<0xFF800000> : vector<16xf32>
    %98 = vector.multi_reduction <maximumf>, %97, %cst_28 [1] : vector<16x16xf32> to vector<16xf32>
    %99 = vector.shape_cast %98 : vector<16xf32> to vector<16x1xf32>
    %100 = vector.broadcast %99 : vector<16x1xf32> to vector<16x16xf32>
    %101 = arith.subf %97, %100 : vector<16x16xf32>
    %102 = math.exp %101 : vector<16x16xf32>
    %cst_29 = arith.constant dense<0.000000e+00> : vector<16xf32>
    %103 = vector.multi_reduction <add>, %102, %cst_29 [1] : vector<16x16xf32> to vector<16xf32>
    %104 = vector.shape_cast %103 : vector<16xf32> to vector<16x1xf32>
    %105 = tpu.reciprocal %104 {approx = true} : vector<16x1xf32> -> vector<16x1xf32>
    %106 = vector.broadcast %105 : vector<16x1xf32> to vector<16x16xf32>
    %107 = arith.mulf %102, %106 : vector<16x16xf32>
    %108 = tpu.concatenate %86, %107 in 0 : vector<16x16xf32>, vector<16x16xf32> -> vector<32x16xf32>
    %109 = vector.extract_strided_slice %63 {offsets = [0, 0], sizes = [16, 16], strides = [1, 1]} : vector<16x18xf32> to vector<16x16xf32>
    %cst_30 = arith.constant dense<0.000000e+00> : vector<32x16xf32>
    %110 = tpu.matmul %108, %109, %cst_30 {dimension_numbers = #tpu.dot_dimension_numbers<[1], [0], [0], [1], [0, 0, 1, 1], [], []>} : vector<32x16xf32>, vector<16x16xf32>, vector<32x16xf32> -> vector<32x16xf32>
    %111 = tpu.iota {dimensions = array<i32: 1>} : vector<16x16xi32>
    %c8_i32_31 = arith.constant 8 : i32
    %112 = vector.broadcast %c8_i32_31 : i32 to vector<16x16xi32>
    %113 = arith.cmpi slt, %111, %112 : vector<16x16xi32>
    %114 = vector.extract_strided_slice %110 {offsets = [0, 0], sizes = [16, 16], strides = [1, 1]} : vector<32x16xf32> to vector<16x16xf32>
    %115 = vector.extract_strided_slice %110 {offsets = [16, 0], sizes = [16, 16], strides = [1, 1]} : vector<32x16xf32> to vector<16x16xf32>
    %116 = arith.select %113, %114, %115 : vector<16x16xi1>, vector<16x16xf32>
    %c41 = arith.constant 41 : index
    %c0_32 = arith.constant 0 : index
    %117 = vector.load %arg2[%c41, %c0_32] : memref<48x128xf32, #tpu.memory_space<vmem>>, vector<1x16xf32>
    %118 = vector.broadcast %117 : vector<1x16xf32> to vector<16x16xf32>
    %119 = arith.addf %116, %118 : vector<16x16xf32>
    %cst_33 = arith.constant 0.000000e+00 : f32
    %120 = vector.broadcast %cst_33 : f32 to vector<16x16xf32>
    %121 = arith.maximumf %119, %120 : vector<16x16xf32>
    %c24 = arith.constant 24 : index
    %c0_34 = arith.constant 0 : index
    %122 = vector.load %arg2[%c24, %c0_34] : memref<48x128xf32, #tpu.memory_space<vmem>>, vector<16x128xf32>
    %cst_35 = arith.constant dense<0.000000e+00> : vector<16x128xf32>
    %123 = tpu.matmul %121, %122, %cst_35 {dimension_numbers = #tpu.dot_dimension_numbers<[1], [0], [0], [1], [0, 0, 1, 1], [], []>} : vector<16x16xf32>, vector<16x128xf32>, vector<16x128xf32> -> vector<16x128xf32>
    %c42 = arith.constant 42 : index
    %c0_36 = arith.constant 0 : index
    %124 = vector.load %arg2[%c42, %c0_36] : memref<48x128xf32, #tpu.memory_space<vmem>>, vector<1x128xf32>
    %125 = vector.broadcast %124 : vector<1x128xf32> to vector<16x128xf32>
    %126 = arith.addf %123, %125 : vector<16x128xf32>
    %c0_37 = arith.constant 0 : index
    %c0_38 = arith.constant 0 : index
    %127 = vector.load %arg3[%c0_37, %c0_38] : memref<16x128xf32, #tpu.memory_space<vmem>>, vector<16x128xf32>
    tpu.vector_store %arg3[%c0_37, %c0_38], %126 {strides = array<i32>} : memref<16x128xf32, #tpu.memory_space<vmem>>, vector<16x128xf32>,
    return
  }
}

</mosaic_0001>

<llo_original>
// kernel: tpu_custom_call.1
$region0: #{tpu_custom_call.1}
  #allocation0 [shape = 'u32[]', space=smem, size = 0x4, offset = 0x4, fixed_abs, tag = 'smem constant byte address 0x4 - core index']
  #allocation1 [shape = 'u32[72,128]{1,0:T(1,128)}', space=vmem, size = 0x9000, scoped, tag = 'internal scratch']
  %s0 = inlined_call_operand.vmem [shape: f32[16,8], index: 0, kind: input, shape index: {}]
  %s1 = inlined_call_operand.vmem [shape: f32[16,16], index: 1, kind: input, shape index: {}]
  %s2 = inlined_call_operand.hbm [shape: f32[48,128], index: 2, kind: input, shape index: {}]
  %s3 = inlined_call_operand.hbm [shape: f32[16,128], index: 3, kind: output, shape index: {}]
  %s4 = sld [smem:[#allocation0]]
  $region26: #{tpu_custom_call.1} parent=0
    _
  %s6 = ssub.s32 1, %s4
  %s7 = scalar_select 0, %s6, %s4
  $region1: #{tpu_custom_call.1} parent=0
    #allocation2 [shape = 'u8[24576]{0}', space=vmem, size = 0x6000, scoped, tag = 'input window, operand 2, single buffered']
    #allocation3 [shape = 's32[1]{0}', space=sflag, size = 0x4, scoped, tag = 'scoped memory for tpu_custom_call.1']
    #allocation4 [shape = 's32[1]{0}', space=sflag, size = 0x4, scoped, tag = 'scoped memory for tpu_custom_call.1']
    #allocation5 [shape = 'u8[8192]{0}', space=vmem, size = 0x2000, scoped, tag = 'output window, operand 0, single buffered']
    %8 = vsyncpa [#allocation3], 0
    %9 = vsyncpa [#allocation4], 0
    // Predicated region
    $region2: #{tpu_custom_call.1} parent=1 // pred_check
      _
    $region3: #{tpu_custom_call.1} parent=1 // pred_check_branch
      %11 = sbr.rel (0) target = $region5
    $region4: #{tpu_custom_call.1} parent=1 // pred_region
      _
    $region5: #{tpu_custom_call.1} parent=1 // pred_fallthru
      _
    // Predicated region
    $region6: #{tpu_custom_call.1} parent=1 // pred_check
      _
    $region7: #{tpu_custom_call.1} parent=1 // pred_check_branch
      %13 = sbr.rel (0) target = $region9
    $region8: #{tpu_custom_call.1} parent=1 // pred_region
      _
    $region9: #{tpu_custom_call.1} parent=1 // pred_fallthru
      _
    // Predicated region
    $region10: #{tpu_custom_call.1} parent=1 // pred_check
      _
    $region11: #{tpu_custom_call.1} parent=1 // pred_check_branch
      %15 = sbr.rel (0) target = $region13
    $region12: #{tpu_custom_call.1} parent=1 // pred_region
      %17 = vsyncadd [#allocation3], 0
      %s18 = sshll.u32 %s2, 4
      %s19 = int_to_ptr.hbm [resolvable:$true] %s18
      %s20 = sshll.u32 [#allocation2], 4
      %s21 = int_to_ptr.vmem [resolvable:$true] %s20
      %26 = dma.hbm_to_vmem [thread:$0]  %s19, 768, %s21, [#allocation3], 128, 128, 8
    $region13: #{tpu_custom_call.1} parent=1 // pred_fallthru
      _
    // Predicated region
    $region14: #{tpu_custom_call.1} parent=1 // pred_check
      _
    $region15: #{tpu_custom_call.1} parent=1 // pred_check_branch
      %28 = sbr.rel (0) target = $region17
    $region16: #{tpu_custom_call.1} parent=1 // pred_region
      %30 = dma.done [#allocation3], 768
    $region17: #{tpu_custom_call.1} parent=1 // pred_fallthru
      _
    %v31 = vld [vmem:[%s1] sm:$0xff]
    %v32 = vld [vmem:[%s1 + $0x8] sm:$0xff]
    %v33 = vld [vmem:[%s0] sm:$0xff]
    %v34 = vld [vmem:[%s0 + $0x8] sm:$0xff]
    %v35 = vld [vmem:[#allocation2] sm:$0xff]
    %vm36 = vcmask 64512
    %v38 = vsel %vm36, %v33, 0
    %v41 = vsel %vm36, %v34, 0
    %43 = vmatpush.msra.mxu0 0.0
    %44 = vmatpush.msra.mxu0 0.0
    %45 = vmatpush.msra.mxu0 0.0
    %46 = vmatpush.msra.mxu0 0.0
    %47 = vmatpush.msra.mxu0 0.0
    %48 = vmatpush.msra.mxu0 0.0
    %49 = vmatpush.msra.mxu0 0.0
    %50 = vmatpush.msra.mxu0 0.0
    %51 = vmatpush.msra.mxu0 0.0
    %52 = vmatpush.msra.mxu0 0.0
    %53 = vmatpush.msra.mxu0 0.0
    %54 = vmatpush.msra.mxu0 0.0
    %55 = vmatpush.msra.mxu0 0.0
    %56 = vmatpush.msra.mxu0 0.0
    %57 = vmatpush.msra.mxu0 0.0
    %58 = vmatpush.msra.mxu0 %v35
    %59 = vmatmul.f32.gmra.mxu0 %v38
    %v60 = vpop.f32.mrf.mxu0
    %v61 = vadd.f32 0.0, %v60
    %62 = vmatmul.f32.gmra.mxu0 %v41
    %v63 = vpop.f32.mrf.mxu0
    %v64 = vadd.f32 0.0, %v63
    %65 = vdwg.mxu0
    %v66 = vld [vmem:[#allocation2 + $0x2b] sm:$0x3]
    %v68 = vsel %vm36, %v66, 0
    %70 = vmatpush.xpose.msra.mxu0 0.0
    %71 = vmatpush.xpose.msra.mxu0 0.0
    %72 = vmatpush.xpose.msra.mxu0 0.0
    %73 = vmatpush.xpose.msra.mxu0 0.0
    %74 = vmatpush.xpose.msra.mxu0 0.0
    %75 = vmatpush.xpose.msra.mxu0 0.0
    %76 = vmatpush.xpose.msra.mxu0 0.0
    %77 = vmatpush.xpose.msra.mxu0 0.0
    %78 = vmatpush.xpose.msra.mxu0 0.0
    %79 = vmatpush.xpose.msra.mxu0 0.0
    %80 = vmatpush.xpose.msra.mxu0 0.0
    %81 = vmatpush.xpose.msra.mxu0 0.0
    %82 = vmatpush.xpose.msra.mxu0 0.0
    %83 = vmatpush.xpose.msra.mxu0 0.0
    %84 = vmatpush.xpose.msra.mxu0 %v41
    %85 = vmatpush.xpose.msra.mxu0 %v38
    %86 = vmatmul.f32.gmra.mxu0 %v68
    %v87 = vpop.f32.mrf.mxu0
    %v88 = vadd.f32 0.0, %v87
    %89 = vdwg.mxu0
    %91 = vset.pattern.permute.xlu0 16
    %92 = vperm.xlu0 %91, %v61
    %v93 = vpop.permute.xlu0 %92
    %96 = vset.pattern.permute.xlu0 16
    %97 = vperm.xlu0 %96, %v64
    %v98 = vpop.permute.xlu0 %97
    %v100 = vperm.slane %v88, 0
    %v101 = vadd.f32 %v93, %v100
    %v102 = vadd.f32 %v98, %v100
    %vm103 = vcmp.gt.f32.partialorder %v101, 0.0
    %vm104 = vcmp.gt.f32.partialorder %v102, 0.0
    %v105 = vmul.f32 %v101, 0.2
    %v106 = vmul.f32 %v102, 0.2
    %v107 = vsel %vm103, %v101, %v105
    %v108 = vsel %vm104, %v102, %v106
    %v109 = vadd.f32 %v107, %v31
    %v110 = vadd.f32 %v108, %v32
    %vm111 = vcmask 130048
    %v112 = vsel %vm111, %v109, -inf
    %113 = vmax.xlane.f32.xlu0 %v112
    %v114 = vpop.xlane.xlu0 %113
    %v115 = vsel %vm111, %v110, -inf
    %116 = vmax.xlane.f32.xlu0 %v115
    %v117 = vpop.xlane.xlu0 %116
    %v118 = vsub.f32 %v109, %v114
    %v119 = vsub.f32 %v110, %v117
    %v120 = vmul.f32 %v118, 1.442695
    %v121 = vpow.pop %v120
    %v122 = vmul.f32 %v119, 1.442695
    %v123 = vpow.pop %v122
    %v124 = vsel %vm111, %v121, 0.0
    %125 = vadd.xlane.f32.xlu0 %v124
    %v126 = vpop.xlane.xlu0 %125
    %v127 = vsel %vm111, %v123, 0.0
    %128 = vadd.xlane.f32.xlu0 %v127
    %v129 = vpop.xlane.xlu0 %128
    %v130 = vrcp.pop %v126
    %v131 = vrcp.pop %v129
    %v132 = vmul.f32 %v121, %v130
    %v133 = vmul.f32 %v123, %v131
    %134 = vset.pattern.permute.xlu0 17
    %135 = vperm.xlu0 %134, %v61
    %v136 = vpop.permute.xlu0 %135
    %138 = vset.pattern.permute.xlu0 17
    %139 = vperm.xlu0 %138, %v64
    %v140 = vpop.permute.xlu0 %139
    %v142 = vperm.slane %v88, 1
    %v143 = vadd.f32 %v136, %v142
    %v144 = vadd.f32 %v140, %v142
    %vm145 = vcmp.gt.f32.partialorder %v143, 0.0
    %vm146 = vcmp.gt.f32.partialorder %v144, 0.0
    %v147 = vmul.f32 %v143, 0.2
    %v148 = vmul.f32 %v144, 0.2
    %v149 = vsel %vm145, %v143, %v147
    %v150 = vsel %vm146, %v144, %v148
    %v151 = vadd.f32 %v149, %v31
    %v152 = vadd.f32 %v150, %v32
    %v153 = vsel %vm111, %v151, -inf
    %154 = vmax.xlane.f32.xlu0 %v153
    %v155 = vpop.xlane.xlu0 %154
    %v156 = vsel %vm111, %v152, -inf
    %157 = vmax.xlane.f32.xlu0 %v156
    %v158 = vpop.xlane.xlu0 %157
    %v159 = vsub.f32 %v151, %v155
    %v160 = vsub.f32 %v152, %v158
    %v161 = vmul.f32 %v159, 1.442695
    %v162 = vpow.pop %v161
    %v163 = vmul.f32 %v160, 1.442695
    %v164 = vpow.pop %v163
    %v165 = vsel %vm111, %v162, 0.0
    %166 = vadd.xlane.f32.xlu0 %v165
    %v167 = vpop.xlane.xlu0 %166
    %v168 = vsel %vm111, %v164, 0.0
    %169 = vadd.xlane.f32.xlu0 %v168
    %v170 = vpop.xlane.xlu0 %169
    %v171 = vrcp.pop %v167
    %v172 = vrcp.pop %v170
    %v173 = vmul.f32 %v162, %v171
    %v174 = vmul.f32 %v164, %v172
    %v176 = vsel %vm111, %v132, 0
    %v179 = vsel %vm111, %v133, 0
    %v182 = vsel %vm111, %v173, 0
    %v185 = vsel %vm111, %v174, 0
    %187 = vmatpush.msra.mxu0 0.0
    %188 = vmatpush.msra.mxu0 0.0
    %189 = vmatpush.msra.mxu0 0.0
    %190 = vmatpush.msra.mxu0 0.0
    %191 = vmatpush.msra.mxu0 0.0
    %192 = vmatpush.msra.mxu0 0.0
    %193 = vmatpush.msra.mxu0 0.0
    %194 = vmatpush.msra.mxu0 0.0
    %195 = vmatpush.msra.mxu0 0.0
    %196 = vmatpush.msra.mxu0 0.0
    %197 = vmatpush.msra.mxu0 0.0
    %198 = vmatpush.msra.mxu0 0.0
    %199 = vmatpush.msra.mxu0 0.0
    %200 = vmatpush.msra.mxu0 0.0
    %201 = vmatpush.msra.mxu0 %v64
    %202 = vmatpush.msra.mxu0 %v61
    %203 = vmatmul.f32.gmra.mxu0 %v176
    %v204 = vpop.f32.mrf.mxu0
    %v205 = vadd.f32 0.0, %v204
    %206 = vmatmul.f32.gmra.mxu0 %v179
    %v207 = vpop.f32.mrf.mxu0
    %v208 = vadd.f32 0.0, %v207
    %209 = vmatmul.f32.gmra.mxu0 %v182
    %v210 = vpop.f32.mrf.mxu0
    %v211 = vadd.f32 0.0, %v210
    %212 = vmatmul.f32.gmra.mxu0 %v185
    %v213 = vpop.f32.mrf.mxu0
    %v214 = vadd.f32 0.0, %v213
    %215 = vdwg.mxu0
    %v216 = vlaneseq
    %v217 = vand.u32 %v216, 127
    %vm218 = vcmp.lt.s32.totalorder %v217, 8
    %v219 = vsel %vm218, %v205, %v211
    %v220 = vsel %vm218, %v208, %v214
    %v221 = vld [vmem:[#allocation2 + $0x28] sm:$0x1]
    %v222 = vperm.slane %v221, 0
    %v223 = vadd.f32 %v219, %v222
    %v224 = vadd.f32 %v220, %v222
    %v225 = vmax.f32 %v223, 0.0
    %v226 = vmax.f32 %v224, 0.0
    %v227 = vld [vmem:[#allocation2 + $0x8] sm:$0xff]
    %v228 = vld [vmem:[#allocation2 + $0x10] sm:$0xff]
    %v230 = vsel %vm111, %v225, 0
    %v233 = vsel %vm111, %v226, 0
    %235 = vmatpush.msra.mxu0 0.0
    %236 = vmatpush.msra.mxu0 0.0
    %237 = vmatpush.msra.mxu0 0.0
    %238 = vmatpush.msra.mxu0 0.0
    %239 = vmatpush.msra.mxu0 0.0
    %240 = vmatpush.msra.mxu0 0.0
    %241 = vmatpush.msra.mxu0 0.0
    %242 = vmatpush.msra.mxu0 0.0
    %243 = vmatpush.msra.mxu0 0.0
    %244 = vmatpush.msra.mxu0 0.0
    %245 = vmatpush.msra.mxu0 0.0
    %246 = vmatpush.msra.mxu0 0.0
    %247 = vmatpush.msra.mxu0 0.0
    %248 = vmatpush.msra.mxu0 0.0
    %249 = vmatpush.msra.mxu0 %v228
    %250 = vmatpush.msra.mxu0 %v227
    %251 = vmatmul.f32.gmra.mxu0 %v230
    %v252 = vpop.f32.mrf.mxu0
    %v253 = vadd.f32 0.0, %v252
    %254 = vmatmul.f32.gmra.mxu0 %v233
    %v255 = vpop.f32.mrf.mxu0
    %v256 = vadd.f32 0.0, %v255
    %257 = vdwg.mxu0
    %v258 = vld [vmem:[#allocation2 + $0x2d] sm:$0x3]
    %v260 = vsel %vm111, %v258, 0
    %262 = vmatpush.xpose.msra.mxu0 0.0
    %263 = vmatpush.xpose.msra.mxu0 0.0
    %264 = vmatpush.xpose.msra.mxu0 0.0
    %265 = vmatpush.xpose.msra.mxu0 0.0
    %266 = vmatpush.xpose.msra.mxu0 0.0
    %267 = vmatpush.xpose.msra.mxu0 0.0
    %268 = vmatpush.xpose.msra.mxu0 0.0
    %269 = vmatpush.xpose.msra.mxu0 0.0
    %270 = vmatpush.xpose.msra.mxu0 0.0
    %271 = vmatpush.xpose.msra.mxu0 0.0
    %272 = vmatpush.xpose.msra.mxu0 0.0
    %273 = vmatpush.xpose.msra.mxu0 0.0
    %274 = vmatpush.xpose.msra.mxu0 0.0
    %275 = vmatpush.xpose.msra.mxu0 0.0
    %276 = vmatpush.xpose.msra.mxu0 %v233
    %277 = vmatpush.xpose.msra.mxu0 %v230
    %278 = vmatmul.f32.gmra.mxu0 %v260
    %v279 = vpop.f32.mrf.mxu0
    %v280 = vadd.f32 0.0, %v279
    %281 = vdwg.mxu0
    %283 = vset.pattern.permute.xlu0 16
    %284 = vperm.xlu0 %283, %v253
    %v285 = vpop.permute.xlu0 %284
    %288 = vset.pattern.permute.xlu0 16
    %289 = vperm.xlu0 %288, %v256
    %v290 = vpop.permute.xlu0 %289
    %v292 = vperm.slane %v280, 0
    %v293 = vadd.f32 %v285, %v292
    %v294 = vadd.f32 %v290, %v292
    %vm295 = vcmp.gt.f32.partialorder %v293, 0.0
    %vm296 = vcmp.gt.f32.partialorder %v294, 0.0
    %v297 = vmul.f32 %v293, 0.2
    %v298 = vmul.f32 %v294, 0.2
    %v299 = vsel %vm295, %v293, %v297
    %v300 = vsel %vm296, %v294, %v298
    %v301 = vadd.f32 %v299, %v31
    %v302 = vadd.f32 %v300, %v32
    %v303 = vsel %vm111, %v301, -inf
    %304 = vmax.xlane.f32.xlu0 %v303
    %v305 = vpop.xlane.xlu0 %304
    %v306 = vsel %vm111, %v302, -inf
    %307 = vmax.xlane.f32.xlu0 %v306
    %v308 = vpop.xlane.xlu0 %307
    %v309 = vsub.f32 %v301, %v305
    %v310 = vsub.f32 %v302, %v308
    %v311 = vmul.f32 %v309, 1.442695
    %v312 = vpow.pop %v311
    %v313 = vmul.f32 %v310, 1.442695
    %v314 = vpow.pop %v313
    %v315 = vsel %vm111, %v312, 0.0
    %316 = vadd.xlane.f32.xlu0 %v315
    %v317 = vpop.xlane.xlu0 %316
    %v318 = vsel %vm111, %v314, 0.0
    %319 = vadd.xlane.f32.xlu0 %v318
    %v320 = vpop.xlane.xlu0 %319
    %v321 = vrcp.pop %v317
    %v322 = vrcp.pop %v320
    %v323 = vmul.f32 %v312, %v321
    %v324 = vmul.f32 %v314, %v322
    %325 = vset.pattern.permute.xlu0 17
    %326 = vperm.xlu0 %325, %v253
    %v327 = vpop.permute.xlu0 %326
    %329 = vset.pattern.permute.xlu0 17
    %330 = vperm.xlu0 %329, %v256
    %v331 = vpop.permute.xlu0 %330
    %v333 = vperm.slane %v280, 1
    %v334 = vadd.f32 %v327, %v333
    %v335 = vadd.f32 %v331, %v333
    %vm336 = vcmp.gt.f32.partialorder %v334, 0.0
    %vm337 = vcmp.gt.f32.partialorder %v335, 0.0
    %v338 = vmul.f32 %v334, 0.2
    %v339 = vmul.f32 %v335, 0.2
    %v340 = vsel %vm336, %v334, %v338
    %v341 = vsel %vm337, %v335, %v339
    %v342 = vadd.f32 %v340, %v31
    %v343 = vadd.f32 %v341, %v32
    %v344 = vsel %vm111, %v342, -inf
    %345 = vmax.xlane.f32.xlu0 %v344
    %v346 = vpop.xlane.xlu0 %345
    %v347 = vsel %vm111, %v343, -inf
    %348 = vmax.xlane.f32.xlu0 %v347
    %v349 = vpop.xlane.xlu0 %348
    %v350 = vsub.f32 %v342, %v346
    %v351 = vsub.f32 %v343, %v349
    %v352 = vmul.f32 %v350, 1.442695
    %v353 = vpow.pop %v352
    %v354 = vmul.f32 %v351, 1.442695
    %v355 = vpow.pop %v354
    %v356 = vsel %vm111, %v353, 0.0
    %357 = vadd.xlane.f32.xlu0 %v356
    %v358 = vpop.xlane.xlu0 %357
    %v359 = vsel %vm111, %v355, 0.0
    %360 = vadd.xlane.f32.xlu0 %v359
    %v361 = vpop.xlane.xlu0 %360
    %v362 = vrcp.pop %v358
    %v363 = vrcp.pop %v361
    %v364 = vmul.f32 %v353, %v362
    %v365 = vmul.f32 %v355, %v363
    %v367 = vsel %vm111, %v323, 0
    %v370 = vsel %vm111, %v324, 0
    %v373 = vsel %vm111, %v364, 0
    %v376 = vsel %vm111, %v365, 0
    %378 = vmatpush.msra.mxu0 0.0
    %379 = vmatpush.msra.mxu0 0.0
    %380 = vmatpush.msra.mxu0 0.0
    %381 = vmatpush.msra.mxu0 0.0
    %382 = vmatpush.msra.mxu0 0.0
    %383 = vmatpush.msra.mxu0 0.0
    %384 = vmatpush.msra.mxu0 0.0
    %385 = vmatpush.msra.mxu0 0.0
    %386 = vmatpush.msra.mxu0 0.0
    %387 = vmatpush.msra.mxu0 0.0
    %388 = vmatpush.msra.mxu0 0.0
    %389 = vmatpush.msra.mxu0 0.0
    %390 = vmatpush.msra.mxu0 0.0
    %391 = vmatpush.msra.mxu0 0.0
    %392 = vmatpush.msra.mxu0 %v256
    %393 = vmatpush.msra.mxu0 %v253
    %394 = vmatmul.f32.gmra.mxu0 %v367
    %v395 = vpop.f32.mrf.mxu0
    %v396 = vadd.f32 0.0, %v395
    %397 = vmatmul.f32.gmra.mxu0 %v370
    %v398 = vpop.f32.mrf.mxu0
    %v399 = vadd.f32 0.0, %v398
    %400 = vmatmul.f32.gmra.mxu0 %v373
    %v401 = vpop.f32.mrf.mxu0
    %v402 = vadd.f32 0.0, %v401
    %403 = vmatmul.f32.gmra.mxu0 %v376
    %v404 = vpop.f32.mrf.mxu0
    %v405 = vadd.f32 0.0, %v404
    %406 = vdwg.mxu0
    %v407 = vsel %vm218, %v396, %v402
    %v408 = vsel %vm218, %v399, %v405
    %v409 = vld [vmem:[#allocation2 + $0x29] sm:$0x1]
    %v410 = vperm.slane %v409, 0
    %v411 = vadd.f32 %v407, %v410
    %v412 = vadd.f32 %v408, %v410
    %v413 = vmax.f32 %v411, 0.0
    %v414 = vmax.f32 %v412, 0.0
    %v415 = vld [vmem:[#allocation2 + $0x18] sm:$0xff]
    %v416 = vld [vmem:[#allocation2 + $0x20] sm:$0xff]
    %v417 = vld [vmem:[#allocation2 + $0x2a] sm:$0x1]
    %v418 = vperm.slane %v417, 0
    %v420 = vsel %vm111, %v413, 0
    %v423 = vsel %vm111, %v414, 0
    %425 = vmatpush.msra.mxu0 0.0
    %426 = vmatpush.msra.mxu0 0.0
    %427 = vmatpush.msra.mxu0 0.0
    %428 = vmatpush.msra.mxu0 0.0
    %429 = vmatpush.msra.mxu0 0.0
    %430 = vmatpush.msra.mxu0 0.0
    %431 = vmatpush.msra.mxu0 0.0
    %432 = vmatpush.msra.mxu0 0.0
    %433 = vmatpush.msra.mxu0 0.0
    %434 = vmatpush.msra.mxu0 0.0
    %435 = vmatpush.msra.mxu0 0.0
    %436 = vmatpush.msra.mxu0 0.0
    %437 = vmatpush.msra.mxu0 0.0
    %438 = vmatpush.msra.mxu0 0.0
    %439 = vmatpush.msra.mxu0 %v416
    %440 = vmatpush.msra.mxu0 %v415
    %441 = vmatmul.f32.gmra.mxu0 %v420
    %v442 = vpop.f32.mrf.mxu0
    %v443 = vadd.f32 %v418, %v442
    %444 = vmatmul.f32.gmra.mxu0 %v423
    %v445 = vpop.f32.mrf.mxu0
    %v446 = vadd.f32 %v418, %v445
    %447 = vdwg.mxu0
    %448 = vst [vmem:[#allocation5] sm:$0xff] %v443
    %449 = vst [vmem:[#allocation5 + $0x8] sm:$0xff] %v446
    // Predicated region
    $region18: #{tpu_custom_call.1} parent=1 // pred_check
      _
    $region19: #{tpu_custom_call.1} parent=1 // pred_check_branch
      %451 = sbr.rel (0) target = $region21
    $region20: #{tpu_custom_call.1} parent=1 // pred_region
      %453 = vsyncadd [#allocation4], 0
      %s454 = sshll.u32 [#allocation5], 4
      %s455 = int_to_ptr.vmem [resolvable:$true] %s454
      %s456 = sshll.u32 %s3, 4
      %s457 = int_to_ptr.hbm [resolvable:$true] %s456
      %462 = dma.vmem_to_hbm [thread:$0]  %s455, 256, %s457, [#allocation4], 128, 128, 8
    $region21: #{tpu_custom_call.1} parent=1 // pred_fallthru
      _
    // Predicated region
    $region22: #{tpu_custom_call.1} parent=1 // pred_check
      _
    $region23: #{tpu_custom_call.1} parent=1 // pred_check_branch
      %464 = sbr.rel (0) target = $region25
    $region24: #{tpu_custom_call.1} parent=1 // pred_region
      %466 = dma.done [#allocation4], 256
    $region25: #{tpu_custom_call.1} parent=1 // pred_fallthru
      _
    %467 = vsyncpa [#allocation3], 1
    %468 = vsyncpa [#allocation4], 1

</llo_original>
